<compile_context>
chip_gen: v6e
topology: v6e:2x2x1
jax: 0.10.0
libtpu: 0.0.40
codegen_flags: <defaults>
</compile_context>

<pallas_src>
import jax
import jax.numpy as jnp
from jax.experimental import pallas as pl
from jax.experimental.pallas import tpu as pltpu

EPS = 1e-5
LANE = 128


# ---------------------------------------------------------------------------
# Kernel: 4x (bf16 matmul -> f32 bias add -> ReLU), straight-line, fully fused.
# ---------------------------------------------------------------------------
def mlp_kernel(x_ref, w1, b1, w2, b2, w3, b3, wo, bo, out_ref):
    # Layer 1: Linear (+ folded BN1) -> ReLU
    h = jnp.dot(x_ref[...], w1[...], preferred_element_type=jnp.float32) + b1[...]
    h = jnp.maximum(h, 0.0).astype(jnp.bfloat16)

    # Layer 2: Linear (+ folded BN2) -> ReLU
    h = jnp.dot(h, w2[...], preferred_element_type=jnp.float32) + b2[...]
    h = jnp.maximum(h, 0.0).astype(jnp.bfloat16)
    # TODO(synk): nn.Dropout(p=0.2) is identity in eval mode; training-mode RNG dropout omitted.

    # Layer 3: Linear (+ folded BN3) -> ReLU
    h = jnp.dot(h, w3[...], preferred_element_type=jnp.float32) + b3[...]
    h = jnp.maximum(h, 0.0).astype(jnp.bfloat16)
    # TODO(synk): second dropout also identity (eval mode).

    # Output layer: lane-dense (class dim zero-padded to 128 in the wrapper).
    out_ref[...] = (jnp.dot(h, wo[...], preferred_element_type=jnp.float32)
                    + bo[...]).astype(out_ref.dtype)


# ---------------------------------------------------------------------------
# Host-side helpers
# ---------------------------------------------------------------------------
def _round_up(n, m):
    return ((n + m - 1) // m) * m


def _pad_to(a, shape):
    pads = [(0, t - s) for s, t in zip(a.shape, shape)]
    return jnp.pad(a, pads) if any(p for _, p in pads) else a


def _pick_tile(batch, max_tile=512):
    """Largest batch tile <= max_tile that divides B (multiple of 8 when tiling)."""
    if batch <= max_tile:
        return batch
    for tb in range(max_tile, 0, -8):
        if batch % tb == 0:
            return tb
    return batch


def fold_and_pack(params):
    """Fold eval-mode BatchNorm + linear biases into each Linear, pad the final
    hidden / class dims to lane width, and cast matmul weights to bf16.

    `params` layout (PyTorch-equivalent, weights pre-transposed to [in, out]):
      [w1,b1,g1,be1,m1,v1, w2,b2,g2,be2,m2,v2, w3,b3,g3,be3,m3,v3, wo,bo]
    Returns (kernel_params_tuple, padded_class_dim).
    """
    idx = 0
    folded = []
    for _ in range(3):
        w, b, g, be, m, v = params[idx:idx + 6]
        idx += 6
        scale = g * jax.lax.rsqrt(v + EPS)               # (1, n)
        folded.append((w * scale, (b - m) * scale + be))  # fold BN into W, b
    wo, bo = params[idx], params[idx + 1]
    folded.append((wo, bo))

    (w1, b1), (w2, b2), (w3, b3), (wo, bo) = folded

    # Pad last hidden dim and class dim up to 128 lanes (zero padding is exact:
    # padded h columns are relu(0)=0 and padded wo rows/cols are 0).
    n3_pad = _round_up(w3.shape[1], LANE)
    c_pad = _round_up(wo.shape[1], LANE)
    w3 = _pad_to(w3, (w3.shape[0], n3_pad))
    b3 = _pad_to(b3, (1, n3_pad))
    wo = _pad_to(wo, (n3_pad, c_pad))
    bo = _pad_to(bo, (1, c_pad))

    bf16 = lambda a: a.astype(jnp.bfloat16)
    f32 = lambda a: a.astype(jnp.float32)
    kernel_params = (bf16(w1), f32(b1),
                     bf16(w2), f32(b2),
                     bf16(w3), f32(b3),
                     bf16(wo), f32(bo))
    return kernel_params, c_pad


def multiclass_forward(x, kernel_params, num_class):
    """x: [B, num_feature] float32; kernel_params: 8-tuple from fold_and_pack."""
    B, F = x.shape
    TB = _pick_tile(B)
    c_pad = kernel_params[-1].shape[-1]

    x_bf16 = x.astype(jnp.bfloat16)

    in_specs = [pl.BlockSpec((TB, F), lambda i: (i, 0))]
    for p in kernel_params:
        in_specs.append(pl.BlockSpec(p.shape, lambda i: (0, 0)))
    out_specs = pl.BlockSpec((TB, c_pad), lambda i: (i, 0))

    out_padded = pl.pallas_call(
        mlp_kernel,
        out_shape=jax.ShapeDtypeStruct((B, c_pad), jnp.float32),
        grid_spec=pltpu.PrefetchScalarGridSpec(
            num_scalar_prefetch=0,
            grid=(B // TB,),
            in_specs=in_specs,
            out_specs=out_specs,
        ),
        compiler_params=pltpu.CompilerParams(
            dimension_semantics=("parallel",)),
    )(x_bf16, *kernel_params)

    return out_padded[:, :num_class]


def init_params(key, num_feature, num_class, hidden_sizes):
    """Deterministic synthetic parameters matching the PyTorch module's shapes
    (Linear weights already transposed to [in, out]; biases/BN params as [1, n])."""
    n1, n2, n3 = hidden_sizes
    dims = [(num_feature, n1), (n1, n2), (n2, n3), (n3, num_class)]
    params = []
    keys = jax.random.split(key, 32)
    ki = 0

    def nxt():
        nonlocal ki
        k = keys[ki]
        ki += 1
        return k

    for li, (fan_in, fan_out) in enumerate(dims):
        bound = 1.0 / jnp.sqrt(float(fan_in))
        w = jax.random.uniform(nxt(), (fan_in, fan_out), jnp.float32, -bound, bound)
        b = jax.random.uniform(nxt(), (1, fan_out), jnp.float32, -bound, bound)
        params.extend([w, b])
        if li < 3:  # batchnorm after first three linears
            n = fan_out
            gamma = jax.random.uniform(nxt(), (1, n), jnp.float32, 0.5, 1.5)
            beta = jax.random.uniform(nxt(), (1, n), jnp.float32, -0.1, 0.1)
            rmean = jax.random.uniform(nxt(), (1, n), jnp.float32, -0.2, 0.2)
            rvar = jax.random.uniform(nxt(), (1, n), jnp.float32, 0.8, 1.2)
            params.extend([gamma, beta, rmean, rvar])
    return params


if __name__ == "__main__":
    key = jax.random.PRNGKey(0)
    k_x, k_p = jax.random.split(key)

    batch = 8
    num_feature = 32
    num_class = 8
    hidden_sizes = (128, 128, 64)

    x = jax.random.normal(k_x, (batch, num_feature), jnp.float32)
    params = init_params(k_p, num_feature, num_class, hidden_sizes)

    kernel_params, _ = fold_and_pack(params)
    out = multiclass_forward(x, kernel_params, num_class)
    out = jax.block_until_ready(out)

    assert out.shape == (batch, num_class)
    assert jnp.all(jnp.isfinite(out))
    print("KERNEL_OK")
</pallas_src>

<mosaic_0001>
module attributes {stable_mosaic.version = 11 : i64} {
  func.func @mlp_kernel(%arg0: i32, %arg1: memref<8x32xbf16, #tpu.memory_space<vmem>>, %arg2: memref<32x128xbf16, #tpu.memory_space<vmem>>, %arg3: memref<1x128xf32, #tpu.memory_space<vmem>>, %arg4: memref<128x128xbf16, #tpu.memory_space<vmem>>, %arg5: memref<1x128xf32, #tpu.memory_space<vmem>>, %arg6: memref<128x128xbf16, #tpu.memory_space<vmem>>, %arg7: memref<1x128xf32, #tpu.memory_space<vmem>>, %arg8: memref<128x128xbf16, #tpu.memory_space<vmem>>, %arg9: memref<1x128xf32, #tpu.memory_space<vmem>>, %arg10: memref<8x128xf32, #tpu.memory_space<vmem>>) attributes {dimension_semantics = [#tpu.dimension_semantics<parallel>], iteration_bounds = array<i64: 1>, scalar_prefetch = 0 : i64, scratch_operands = 0 : i64, tpu.core_type = #tpu.core_type<tc>, window_params = [{transform_indices = @transform_0, window_bounds = array<i64: 8, 32>}, {pipeline_mode = #tpu.pipeline_mode<synchronous>, transform_indices = @transform_1, window_bounds = array<i64: 32, 128>}, {pipeline_mode = #tpu.pipeline_mode<synchronous>, transform_indices = @transform_2, window_bounds = array<i64: 1, 128>}, {pipeline_mode = #tpu.pipeline_mode<synchronous>, transform_indices = @transform_3, window_bounds = array<i64: 128, 128>}, {pipeline_mode = #tpu.pipeline_mode<synchronous>, transform_indices = @transform_4, window_bounds = array<i64: 1, 128>}, {pipeline_mode = #tpu.pipeline_mode<synchronous>, transform_indices = @transform_5, window_bounds = array<i64: 128, 128>}, {pipeline_mode = #tpu.pipeline_mode<synchronous>, transform_indices = @transform_6, window_bounds = array<i64: 1, 128>}, {pipeline_mode = #tpu.pipeline_mode<synchronous>, transform_indices = @transform_7, window_bounds = array<i64: 128, 128>}, {pipeline_mode = #tpu.pipeline_mode<synchronous>, transform_indices = @transform_8, window_bounds = array<i64: 1, 128>}, {transform_indices = @transform_9, window_bounds = array<i64: 8, 128>}]} {
    %c0 = arith.constant 0 : index
    %c0_0 = arith.constant 0 : index
    %0 = vector.load %arg1[%c0, %c0_0] : memref<8x32xbf16, #tpu.memory_space<vmem>>, vector<8x32xbf16>
    %c0_1 = arith.constant 0 : index
    %c0_2 = arith.constant 0 : index
    %1 = vector.load %arg2[%c0_1, %c0_2] : memref<32x128xbf16, #tpu.memory_space<vmem>>, vector<32x128xbf16>
    %cst = arith.constant dense<0.000000e+00> : vector<8x128xf32>
    %2 = tpu.matmul %0, %1, %cst {dimension_numbers = #tpu.dot_dimension_numbers<[1], [0], [0], [1], [0, 0, 1, 1], [], []>} : vector<8x32xbf16>, vector<32x128xbf16>, vector<8x128xf32> -> vector<8x128xf32>
    %c0_3 = arith.constant 0 : index
    %c0_4 = arith.constant 0 : index
    %3 = vector.load %arg3[%c0_3, %c0_4] : memref<1x128xf32, #tpu.memory_space<vmem>>, vector<1x128xf32>
    %4 = vector.broadcast %3 : vector<1x128xf32> to vector<8x128xf32>
    %5 = arith.addf %2, %4 : vector<8x128xf32>
    %cst_5 = arith.constant 0.000000e+00 : f32
    %6 = vector.broadcast %cst_5 : f32 to vector<8x128xf32>
    %7 = arith.maximumf %5, %6 : vector<8x128xf32>
    %8 = arith.truncf %7 : vector<8x128xf32> to vector<8x128xbf16>
    %c0_6 = arith.constant 0 : index
    %c0_7 = arith.constant 0 : index
    %9 = vector.load %arg4[%c0_6, %c0_7] : memref<128x128xbf16, #tpu.memory_space<vmem>>, vector<128x128xbf16>
    %cst_8 = arith.constant dense<0.000000e+00> : vector<8x128xf32>
    %10 = tpu.matmul %8, %9, %cst_8 {dimension_numbers = #tpu.dot_dimension_numbers<[1], [0], [0], [1], [0, 0, 1, 1], [], []>} : vector<8x128xbf16>, vector<128x128xbf16>, vector<8x128xf32> -> vector<8x128xf32>
    %c0_9 = arith.constant 0 : index
    %c0_10 = arith.constant 0 : index
    %11 = vector.load %arg5[%c0_9, %c0_10] : memref<1x128xf32, #tpu.memory_space<vmem>>, vector<1x128xf32>
    %12 = vector.broadcast %11 : vector<1x128xf32> to vector<8x128xf32>
    %13 = arith.addf %10, %12 : vector<8x128xf32>
    %cst_11 = arith.constant 0.000000e+00 : f32
    %14 = vector.broadcast %cst_11 : f32 to vector<8x128xf32>
    %15 = arith.maximumf %13, %14 : vector<8x128xf32>
    %16 = arith.truncf %15 : vector<8x128xf32> to vector<8x128xbf16>
    %c0_12 = arith.constant 0 : index
    %c0_13 = arith.constant 0 : index
    %17 = vector.load %arg6[%c0_12, %c0_13] : memref<128x128xbf16, #tpu.memory_space<vmem>>, vector<128x128xbf16>
    %cst_14 = arith.constant dense<0.000000e+00> : vector<8x128xf32>
    %18 = tpu.matmul %16, %17, %cst_14 {dimension_numbers = #tpu.dot_dimension_numbers<[1], [0], [0], [1], [0, 0, 1, 1], [], []>} : vector<8x128xbf16>, vector<128x128xbf16>, vector<8x128xf32> -> vector<8x128xf32>
    %c0_15 = arith.constant 0 : index
    %c0_16 = arith.constant 0 : index
    %19 = vector.load %arg7[%c0_15, %c0_16] : memref<1x128xf32, #tpu.memory_space<vmem>>, vector<1x128xf32>
    %20 = vector.broadcast %19 : vector<1x128xf32> to vector<8x128xf32>
    %21 = arith.addf %18, %20 : vector<8x128xf32>
    %cst_17 = arith.constant 0.000000e+00 : f32
    %22 = vector.broadcast %cst_17 : f32 to vector<8x128xf32>
    %23 = arith.maximumf %21, %22 : vector<8x128xf32>
    %24 = arith.truncf %23 : vector<8x128xf32> to vector<8x128xbf16>
    %c0_18 = arith.constant 0 : index
    %c0_19 = arith.constant 0 : index
    %25 = vector.load %arg8[%c0_18, %c0_19] : memref<128x128xbf16, #tpu.memory_space<vmem>>, vector<128x128xbf16>
    %cst_20 = arith.constant dense<0.000000e+00> : vector<8x128xf32>
    %26 = tpu.matmul %24, %25, %cst_20 {dimension_numbers = #tpu.dot_dimension_numbers<[1], [0], [0], [1], [0, 0, 1, 1], [], []>} : vector<8x128xbf16>, vector<128x128xbf16>, vector<8x128xf32> -> vector<8x128xf32>
    %c0_21 = arith.constant 0 : index
    %c0_22 = arith.constant 0 : index
    %27 = vector.load %arg9[%c0_21, %c0_22] : memref<1x128xf32, #tpu.memory_space<vmem>>, vector<1x128xf32>
    %28 = vector.broadcast %27 : vector<1x128xf32> to vector<8x128xf32>
    %29 = arith.addf %26, %28 : vector<8x128xf32>
    %c0_23 = arith.constant 0 : index
    %c0_24 = arith.constant 0 : index
    %30 = vector.load %arg10[%c0_23, %c0_24] : memref<8x128xf32, #tpu.memory_space<vmem>>, vector<8x128xf32>
    tpu.vector_store %arg10[%c0_23, %c0_24], %29 {strides = array<i32>} : memref<8x128xf32, #tpu.memory_space<vmem>>, vector<8x128xf32>,
    return
  }
  func.func @transform_0(%arg0: i32) -> (i32, i32) {
    %c0_i32 = arith.constant 0 : i32
    %c0_i32_0 = arith.constant 0 : i32
    return %arg0, %c0_i32 : i32, i32
  }
  func.func @transform_1(%arg0: i32) -> (i32, i32) {
    %c0_i32 = arith.constant 0 : i32
    %c0_i32_0 = arith.constant 0 : i32
    %c0_i32_1 = arith.constant 0 : i32
    return %c0_i32, %c0_i32_0 : i32, i32
  }
  func.func @transform_2(%arg0: i32) -> (i32, i32) {
    %c0_i32 = arith.constant 0 : i32
    %c0_i32_0 = arith.constant 0 : i32
    %c0_i32_1 = arith.constant 0 : i32
    return %c0_i32, %c0_i32_0 : i32, i32
  }
  func.func @transform_3(%arg0: i32) -> (i32, i32) {
    %c0_i32 = arith.constant 0 : i32
    %c0_i32_0 = arith.constant 0 : i32
    %c0_i32_1 = arith.constant 0 : i32
    return %c0_i32, %c0_i32_0 : i32, i32
  }
  func.func @transform_4(%arg0: i32) -> (i32, i32) {
    %c0_i32 = arith.constant 0 : i32
    %c0_i32_0 = arith.constant 0 : i32
    %c0_i32_1 = arith.constant 0 : i32
    return %c0_i32, %c0_i32_0 : i32, i32
  }
  func.func @transform_5(%arg0: i32) -> (i32, i32) {
    %c0_i32 = arith.constant 0 : i32
    %c0_i32_0 = arith.constant 0 : i32
    %c0_i32_1 = arith.constant 0 : i32
    return %c0_i32, %c0_i32_0 : i32, i32
  }
  func.func @transform_6(%arg0: i32) -> (i32, i32) {
    %c0_i32 = arith.constant 0 : i32
    %c0_i32_0 = arith.constant 0 : i32
    %c0_i32_1 = arith.constant 0 : i32
    return %c0_i32, %c0_i32_0 : i32, i32
  }
  func.func @transform_7(%arg0: i32) -> (i32, i32) {
    %c0_i32 = arith.constant 0 : i32
    %c0_i32_0 = arith.constant 0 : i32
    %c0_i32_1 = arith.constant 0 : i32
    return %c0_i32, %c0_i32_0 : i32, i32
  }
  func.func @transform_8(%arg0: i32) -> (i32, i32) {
    %c0_i32 = arith.constant 0 : i32
    %c0_i32_0 = arith.constant 0 : i32
    %c0_i32_1 = arith.constant 0 : i32
    return %c0_i32, %c0_i32_0 : i32, i32
  }
  func.func @transform_9(%arg0: i32) -> (i32, i32) {
    %c0_i32 = arith.constant 0 : i32
    %c0_i32_0 = arith.constant 0 : i32
    return %arg0, %c0_i32 : i32, i32
  }
}

</mosaic_0001>

<llo_original>
// kernel: tpu_custom_call.1
$region0: #{tpu_custom_call.1}
  #allocation0 [shape = 'u32[]', space=smem, size = 0x4, offset = 0x4, fixed_abs, tag = 'smem constant byte address 0x4 - core index']
  #allocation1 [shape = 'u32[144,128]{1,0:T(1,128)}', space=vmem, size = 0x12000, scoped, tag = 'internal scratch']
  %s0 = inlined_call_operand.hbm [shape: bf16[8,32], index: 0, kind: input, shape index: {}]
  %s1 = inlined_call_operand.hbm [shape: bf16[32,128], index: 1, kind: input, shape index: {}]
  %s2 = inlined_call_operand.vmem [shape: f32[1,128], index: 2, kind: input, shape index: {}]
  %s3 = inlined_call_operand.hbm [shape: bf16[128,128], index: 3, kind: input, shape index: {}]
  %s4 = inlined_call_operand.vmem [shape: f32[1,128], index: 4, kind: input, shape index: {}]
  %s5 = inlined_call_operand.hbm [shape: bf16[128,128], index: 5, kind: input, shape index: {}]
  %s6 = inlined_call_operand.vmem [shape: f32[1,128], index: 6, kind: input, shape index: {}]
  %s7 = inlined_call_operand.hbm [shape: bf16[128,128], index: 7, kind: input, shape index: {}]
  %s8 = inlined_call_operand.vmem [shape: f32[1,128], index: 8, kind: input, shape index: {}]
  %s9 = inlined_call_operand.hbm [shape: f32[8,128], index: 9, kind: output, shape index: {}]
  %s10 = sld [smem:[#allocation0]]
  $region66: #{tpu_custom_call.1} parent=0
    _
  %s12 = ssub.s32 1, %s10
  %s13 = scalar_select 0, %s12, %s10
  $region1: #{tpu_custom_call.1} parent=0
    #allocation2 [shape = 'u8[2048]{0}', space=vmem, size = 0x800, scoped, tag = 'input window, operand 0, single buffered']
    #allocation3 [shape = 's32[1]{0}', space=sflag, size = 0x4, scoped, tag = 'scoped memory for tpu_custom_call.1']
    #allocation4 [shape = 's32[1]{0}', space=sflag, size = 0x4, scoped, tag = 'scoped memory for tpu_custom_call.1']
    #allocation5 [shape = 'u8[8192]{0}', space=vmem, size = 0x2000, scoped, tag = 'input window, operand 1, single buffered']
    #allocation6 [shape = 's32[1]{0}', space=sflag, size = 0x4, scoped, tag = 'scoped memory for tpu_custom_call.1']
    #allocation7 [shape = 'u8[32768]{0}', space=vmem, size = 0x8000, scoped, tag = 'input window, operand 3, single buffered']
    #allocation8 [shape = 'u8[32768]{0}', space=vmem, size = 0x8000, scoped, tag = 'input window, operand 5, single buffered']
    #allocation9 [shape = 's32[1]{0}', space=sflag, size = 0x4, scoped, tag = 'scoped memory for tpu_custom_call.1']
    #allocation10 [shape = 'u8[32768]{0}', space=vmem, size = 0x8000, scoped, tag = 'input window, operand 7, single buffered']
    #allocation11 [shape = 'u8[4096]{0}', space=vmem, size = 0x1000, scoped, tag = 'output window, operand 0, single buffered']
    %14 = vsyncpa [#allocation3], 0
    %15 = vsyncpa [#allocation6], 0
    %16 = vsyncpa [#allocation9], 0
    %17 = vsyncpa [#allocation4], 0
    // Predicated region
    $region2: #{tpu_custom_call.1} parent=1 // pred_check
      _
    $region3: #{tpu_custom_call.1} parent=1 // pred_check_branch
      %19 = sbr.rel (0) target = $region5
    $region4: #{tpu_custom_call.1} parent=1 // pred_region
      %s21 = ssub.s32 64, 64
      %22 = vsyncadd [#allocation3], %s21
      %s24 = sshll.u32 [#allocation2], 4
      %s25 = int_to_ptr.vmem [resolvable:$true] %s24
      %27 = dma.hbm_to_vmem [thread:$0]  %s0, 64, %s25, [#allocation3]
    $region5: #{tpu_custom_call.1} parent=1 // pred_fallthru
      _
    // Predicated region
    $region6: #{tpu_custom_call.1} parent=1 // pred_check
      _
    $region7: #{tpu_custom_call.1} parent=1 // pred_check_branch
      %29 = sbr.rel (0) target = $region9
    $region8: #{tpu_custom_call.1} parent=1 // pred_region
      %s31 = ssub.s32 256, 256
      %32 = vsyncadd [#allocation6], %s31
      %s33 = sshll.u32 [#allocation5], 4
      %s34 = int_to_ptr.vmem [resolvable:$true] %s33
      %39 = dma.hbm_to_vmem [thread:$0]  %s1, 256, %s34, [#allocation6], 64, 64, 4
    $region9: #{tpu_custom_call.1} parent=1 // pred_fallthru
      _
    // Predicated region
    $region10: #{tpu_custom_call.1} parent=1 // pred_check
      _
    $region11: #{tpu_custom_call.1} parent=1 // pred_check_branch
      %41 = sbr.rel (0) target = $region13
    $region12: #{tpu_custom_call.1} parent=1 // pred_region
      _
    $region13: #{tpu_custom_call.1} parent=1 // pred_fallthru
      _
    // Predicated region
    $region14: #{tpu_custom_call.1} parent=1 // pred_check
      _
    $region15: #{tpu_custom_call.1} parent=1 // pred_check_branch
      %43 = sbr.rel (0) target = $region17
    $region16: #{tpu_custom_call.1} parent=1 // pred_region
      %s45 = ssub.s32 1024, 1024
      %46 = vsyncadd [#allocation6], %s45
      %s47 = sshll.u32 [#allocation7], 4
      %s48 = int_to_ptr.vmem [resolvable:$true] %s47
      %53 = dma.hbm_to_vmem [thread:$0]  %s3, 1024, %s48, [#allocation6], 64, 64, 4
    $region17: #{tpu_custom_call.1} parent=1 // pred_fallthru
      _
    // Predicated region
    $region18: #{tpu_custom_call.1} parent=1 // pred_check
      _
    $region19: #{tpu_custom_call.1} parent=1 // pred_check_branch
      %55 = sbr.rel (0) target = $region21
    $region20: #{tpu_custom_call.1} parent=1 // pred_region
      _
    $region21: #{tpu_custom_call.1} parent=1 // pred_fallthru
      _
    // Predicated region
    $region22: #{tpu_custom_call.1} parent=1 // pred_check
      _
    $region23: #{tpu_custom_call.1} parent=1 // pred_check_branch
      %57 = sbr.rel (0) target = $region25
    $region24: #{tpu_custom_call.1} parent=1 // pred_region
      %s59 = ssub.s32 1024, 1024
      %60 = vsyncadd [#allocation9], %s59
      %s61 = sshll.u32 [#allocation8], 4
      %s62 = int_to_ptr.vmem [resolvable:$true] %s61
      %67 = dma.hbm_to_vmem [thread:$0]  %s5, 1024, %s62, [#allocation9], 64, 64, 4
    $region25: #{tpu_custom_call.1} parent=1 // pred_fallthru
      _
    // Predicated region
    $region26: #{tpu_custom_call.1} parent=1 // pred_check
      _
    $region27: #{tpu_custom_call.1} parent=1 // pred_check_branch
      %69 = sbr.rel (0) target = $region29
    $region28: #{tpu_custom_call.1} parent=1 // pred_region
      _
    $region29: #{tpu_custom_call.1} parent=1 // pred_fallthru
      _
    // Predicated region
    $region30: #{tpu_custom_call.1} parent=1 // pred_check
      _
    $region31: #{tpu_custom_call.1} parent=1 // pred_check_branch
      %71 = sbr.rel (0) target = $region33
    $region32: #{tpu_custom_call.1} parent=1 // pred_region
      %s73 = ssub.s32 1024, 1024
      %74 = vsyncadd [#allocation9], %s73
      %s75 = sshll.u32 [#allocation10], 4
      %s76 = int_to_ptr.vmem [resolvable:$true] %s75
      %81 = dma.hbm_to_vmem [thread:$0]  %s7, 1024, %s76, [#allocation9], 64, 64, 4
    $region33: #{tpu_custom_call.1} parent=1 // pred_fallthru
      _
    // Predicated region
    $region34: #{tpu_custom_call.1} parent=1 // pred_check
      _
    $region35: #{tpu_custom_call.1} parent=1 // pred_check_branch
      %83 = sbr.rel (0) target = $region37
    $region36: #{tpu_custom_call.1} parent=1 // pred_region
      _
    $region37: #{tpu_custom_call.1} parent=1 // pred_fallthru
      _
    // Predicated region
    $region38: #{tpu_custom_call.1} parent=1 // pred_check
      _
    $region39: #{tpu_custom_call.1} parent=1 // pred_check_branch
      %85 = sbr.rel (0) target = $region41
    $region40: #{tpu_custom_call.1} parent=1 // pred_region
      %86 = dma.done [#allocation3], 64
    $region41: #{tpu_custom_call.1} parent=1 // pred_fallthru
      _
    // Predicated region
    $region42: #{tpu_custom_call.1} parent=1 // pred_check
      _
    $region43: #{tpu_custom_call.1} parent=1 // pred_check_branch
      %88 = sbr.rel (0) target = $region45
    $region44: #{tpu_custom_call.1} parent=1 // pred_region
      %89 = dma.done [#allocation6], 256
    $region45: #{tpu_custom_call.1} parent=1 // pred_fallthru
      _
    // Predicated region
    $region46: #{tpu_custom_call.1} parent=1 // pred_check
      _
    $region47: #{tpu_custom_call.1} parent=1 // pred_check_branch
      %91 = sbr.rel (0) target = $region49
    $region48: #{tpu_custom_call.1} parent=1 // pred_region
      %92 = dma.done [#allocation6], 1024
    $region49: #{tpu_custom_call.1} parent=1 // pred_fallthru
      _
    // Predicated region
    $region50: #{tpu_custom_call.1} parent=1 // pred_check
      _
    $region51: #{tpu_custom_call.1} parent=1 // pred_check_branch
      %94 = sbr.rel (0) target = $region53
    $region52: #{tpu_custom_call.1} parent=1 // pred_region
      %95 = dma.done [#allocation9], 1024
    $region53: #{tpu_custom_call.1} parent=1 // pred_fallthru
      _
    // Predicated region
    $region54: #{tpu_custom_call.1} parent=1 // pred_check
      _
    $region55: #{tpu_custom_call.1} parent=1 // pred_check_branch
      %97 = sbr.rel (0) target = $region57
    $region56: #{tpu_custom_call.1} parent=1 // pred_region
      %98 = dma.done [#allocation9], 1024
    $region57: #{tpu_custom_call.1} parent=1 // pred_fallthru
      _
    %v100 = vld [vmem:[#allocation2] sm:$0xf]
    %v101 = vld [vmem:[#allocation5] sm:$0xf]
    %v102 = vld [vmem:[#allocation5 + $0x4] sm:$0xf]
    %v103 = vld [vmem:[#allocation5 + $0x8] sm:$0xf]
    %v104 = vld [vmem:[#allocation5 + $0xc] sm:$0xf]
    %v105 = vld [vmem:[%s2] sm:$0x1]
    %v107 = vlaneseq
    %v108 = vshrl.u32 %v107, 7
    %v109 = vsub.s32 0, %v108
    %v110 = vrot.slane %v105, %v109
    %v116 = vunpack.c.l.b16 %v101
    %v117 = vunpack.c.l.b16 %v102
    %v118 = vunpack.c.l.b16 %v103
    %v119 = vunpack.c.l.b16 %v104
    %v120 = vpack.c.b16 %v117, %v116
    %v121 = vpack.c.b16 %v119, %v118
    %vm124 = vcmask 261120
    %v126 = vsel %vm124, %v100, 0
    %128 = vmatprep.subr.bf16.mxu0 0
    %129 = vmatpush1.bf16.msra.mxu0 0
    %130 = vmatprep.subr.bf16.mxu0 0
    %131 = vmatpush1.bf16.msra.mxu0 0
    %132 = vmatprep.subr.bf16.mxu0 0
    %133 = vmatpush1.bf16.msra.mxu0 0
    %134 = vmatprep.subr.bf16.mxu0 0
    %135 = vmatpush1.bf16.msra.mxu0 0
    %136 = vmatprep.subr.bf16.mxu0 0
    %137 = vmatpush1.bf16.msra.mxu0 0
    %138 = vmatprep.subr.bf16.mxu0 0
    %139 = vmatpush1.bf16.msra.mxu0 0
    %140 = vmatprep.subr.bf16.mxu0 0
    %141 = vmatpush1.bf16.msra.mxu0 %v121
    %142 = vmatprep.subr.bf16.mxu0 0
    %143 = vmatpush1.bf16.msra.mxu0 %v120
    %144 = vmatprep.subr.bf16.mxu0 0
    %145 = vmatpush2.bf16.msra.mxu0 0
    %146 = vmatprep.subr.bf16.mxu0 0
    %147 = vmatpush2.bf16.msra.mxu0 0
    %148 = vmatprep.subr.bf16.mxu0 0
    %149 = vmatpush2.bf16.msra.mxu0 0
    %150 = vmatprep.subr.bf16.mxu0 0
    %151 = vmatpush2.bf16.msra.mxu0 0
    %152 = vmatprep.subr.bf16.mxu0 0
    %153 = vmatpush2.bf16.msra.mxu0 0
    %154 = vmatprep.subr.bf16.mxu0 0
    %155 = vmatpush2.bf16.msra.mxu0 0
    %156 = vmatprep.subr.bf16.mxu0 0
    %157 = vmatpush2.bf16.msra.mxu0 0
    %158 = vmatprep.subr.bf16.mxu0 0
    %159 = vmatpush2.bf16.msra.mxu0 0
    %160 = vmatprep.mubr.bf16.mxu0 0
    %161 = vmatmul.mubr.bf16.gmra.mxu0 %v126
    %v162 = vpop.f32.mrf.mxu0
    %v163 = vadd.f32 %v110, %v162
    %v164 = vpop.f32.mrf.mxu0
    %v165 = vpop.f32.mrf.mxu0
    %v166 = vpop.f32.mrf.mxu0
    %167 = vdwg.mxu0
    %v168 = vmax.f32 %v163, 0.0
    %v169 = vpack.c.bf16 %v168, %v168
    %v170 = vld [vmem:[#allocation7] sm:$0xf]
    %v171 = vld [vmem:[#allocation7 + $0x4] sm:$0xf]
    %v172 = vld [vmem:[#allocation7 + $0x8] sm:$0xf]
    %v173 = vld [vmem:[#allocation7 + $0xc] sm:$0xf]
    %v174 = vld [vmem:[#allocation7 + $0x10] sm:$0xf]
    %v175 = vld [vmem:[#allocation7 + $0x14] sm:$0xf]
    %v176 = vld [vmem:[#allocation7 + $0x18] sm:$0xf]
    %v177 = vld [vmem:[#allocation7 + $0x1c] sm:$0xf]
    %v178 = vld [vmem:[#allocation7 + $0x20] sm:$0xf]
    %v179 = vld [vmem:[#allocation7 + $0x24] sm:$0xf]
    %v180 = vld [vmem:[#allocation7 + $0x28] sm:$0xf]
    %v181 = vld [vmem:[#allocation7 + $0x2c] sm:$0xf]
    %v182 = vld [vmem:[#allocation7 + $0x30] sm:$0xf]
    %v183 = vld [vmem:[#allocation7 + $0x34] sm:$0xf]
    %v184 = vld [vmem:[#allocation7 + $0x38] sm:$0xf]
    %v185 = vld [vmem:[#allocation7 + $0x3c] sm:$0xf]
    %v186 = vld [vmem:[%s4] sm:$0x1]
    %v188 = vlaneseq
    %v189 = vshrl.u32 %v188, 7
    %v190 = vsub.s32 0, %v189
    %v191 = vrot.slane %v186, %v190
    %v209 = vunpack.c.l.b16 %v170
    %v210 = vunpack.c.l.b16 %v171
    %v211 = vunpack.c.l.b16 %v172
    %v212 = vunpack.c.l.b16 %v173
    %v213 = vunpack.c.l.b16 %v174
    %v214 = vunpack.c.l.b16 %v175
    %v215 = vunpack.c.l.b16 %v176
    %v216 = vunpack.c.l.b16 %v177
    %v217 = vunpack.c.l.b16 %v178
    %v218 = vunpack.c.l.b16 %v179
    %v219 = vunpack.c.l.b16 %v180
    %v220 = vunpack.c.l.b16 %v181
    %v221 = vunpack.c.l.b16 %v182
    %v222 = vunpack.c.l.b16 %v183
    %v223 = vunpack.c.l.b16 %v184
    %v224 = vunpack.c.l.b16 %v185
    %v225 = vpack.c.b16 %v210, %v209
    %v226 = vpack.c.b16 %v212, %v211
    %v227 = vpack.c.b16 %v214, %v213
    %v228 = vpack.c.b16 %v216, %v215
    %v229 = vpack.c.b16 %v218, %v217
    %v230 = vpack.c.b16 %v220, %v219
    %v231 = vpack.c.b16 %v222, %v221
    %v232 = vpack.c.b16 %v224, %v223
    %241 = vmatprep.subr.bf16.mxu0 0
    %242 = vmatpush1.bf16.msra.mxu0 %v232
    %243 = vmatprep.subr.bf16.mxu0 0
    %244 = vmatpush1.bf16.msra.mxu0 %v231
    %245 = vmatprep.subr.bf16.mxu0 0
    %246 = vmatpush1.bf16.msra.mxu0 %v230
    %247 = vmatprep.subr.bf16.mxu0 0
    %248 = vmatpush1.bf16.msra.mxu0 %v229
    %249 = vmatprep.subr.bf16.mxu0 0
    %250 = vmatpush1.bf16.msra.mxu0 %v228
    %251 = vmatprep.subr.bf16.mxu0 0
    %252 = vmatpush1.bf16.msra.mxu0 %v227
    %253 = vmatprep.subr.bf16.mxu0 0
    %254 = vmatpush1.bf16.msra.mxu0 %v226
    %255 = vmatprep.subr.bf16.mxu0 0
    %256 = vmatpush1.bf16.msra.mxu0 %v225
    %257 = vmatprep.subr.bf16.mxu0 0
    %258 = vmatpush2.bf16.msra.mxu0 0
    %259 = vmatprep.subr.bf16.mxu0 0
    %260 = vmatpush2.bf16.msra.mxu0 0
    %261 = vmatprep.subr.bf16.mxu0 0
    %262 = vmatpush2.bf16.msra.mxu0 0
    %263 = vmatprep.subr.bf16.mxu0 0
    %264 = vmatpush2.bf16.msra.mxu0 0
    %265 = vmatprep.subr.bf16.mxu0 0
    %266 = vmatpush2.bf16.msra.mxu0 0
    %267 = vmatprep.subr.bf16.mxu0 0
    %268 = vmatpush2.bf16.msra.mxu0 0
    %269 = vmatprep.subr.bf16.mxu0 0
    %270 = vmatpush2.bf16.msra.mxu0 0
    %271 = vmatprep.subr.bf16.mxu0 0
    %272 = vmatpush2.bf16.msra.mxu0 0
    %273 = vmatprep.mubr.bf16.mxu0 0
    %274 = vmatmul.mubr.bf16.gmra.mxu0 %v169
    %v275 = vpop.f32.mrf.mxu0
    %v276 = vadd.f32 %v191, %v275
    %v277 = vpop.f32.mrf.mxu0
    %v278 = vpop.f32.mrf.mxu0
    %v279 = vpop.f32.mrf.mxu0
    %280 = vdwg.mxu0
    %v281 = vmax.f32 %v276, 0.0
    %v282 = vpack.c.bf16 %v281, %v281
    %v283 = vld [vmem:[#allocation8] sm:$0xf]
    %v284 = vld [vmem:[#allocation8 + $0x4] sm:$0xf]
    %v285 = vld [vmem:[#allocation8 + $0x8] sm:$0xf]
    %v286 = vld [vmem:[#allocation8 + $0xc] sm:$0xf]
    %v287 = vld [vmem:[#allocation8 + $0x10] sm:$0xf]
    %v288 = vld [vmem:[#allocation8 + $0x14] sm:$0xf]
    %v289 = vld [vmem:[#allocation8 + $0x18] sm:$0xf]
    %v290 = vld [vmem:[#allocation8 + $0x1c] sm:$0xf]
    %v291 = vld [vmem:[#allocation8 + $0x20] sm:$0xf]
    %v292 = vld [vmem:[#allocation8 + $0x24] sm:$0xf]
    %v293 = vld [vmem:[#allocation8 + $0x28] sm:$0xf]
    %v294 = vld [vmem:[#allocation8 + $0x2c] sm:$0xf]
    %v295 = vld [vmem:[#allocation8 + $0x30] sm:$0xf]
    %v296 = vld [vmem:[#allocation8 + $0x34] sm:$0xf]
    %v297 = vld [vmem:[#allocation8 + $0x38] sm:$0xf]
    %v298 = vld [vmem:[#allocation8 + $0x3c] sm:$0xf]
    %v299 = vld [vmem:[%s6] sm:$0x1]
    %v301 = vlaneseq
    %v302 = vshrl.u32 %v301, 7
    %v303 = vsub.s32 0, %v302
    %v304 = vrot.slane %v299, %v303
    %v322 = vunpack.c.l.b16 %v283
    %v323 = vunpack.c.l.b16 %v284
    %v324 = vunpack.c.l.b16 %v285
    %v325 = vunpack.c.l.b16 %v286
    %v326 = vunpack.c.l.b16 %v287
    %v327 = vunpack.c.l.b16 %v288
    %v328 = vunpack.c.l.b16 %v289
    %v329 = vunpack.c.l.b16 %v290
    %v330 = vunpack.c.l.b16 %v291
    %v331 = vunpack.c.l.b16 %v292
    %v332 = vunpack.c.l.b16 %v293
    %v333 = vunpack.c.l.b16 %v294
    %v334 = vunpack.c.l.b16 %v295
    %v335 = vunpack.c.l.b16 %v296
    %v336 = vunpack.c.l.b16 %v297
    %v337 = vunpack.c.l.b16 %v298
    %v338 = vpack.c.b16 %v323, %v322
    %v339 = vpack.c.b16 %v325, %v324
    %v340 = vpack.c.b16 %v327, %v326
    %v341 = vpack.c.b16 %v329, %v328
    %v342 = vpack.c.b16 %v331, %v330
    %v343 = vpack.c.b16 %v333, %v332
    %v344 = vpack.c.b16 %v335, %v334
    %v345 = vpack.c.b16 %v337, %v336
    %354 = vmatprep.subr.bf16.mxu0 0
    %355 = vmatpush1.bf16.msra.mxu0 %v345
    %356 = vmatprep.subr.bf16.mxu0 0
    %357 = vmatpush1.bf16.msra.mxu0 %v344
    %358 = vmatprep.subr.bf16.mxu0 0
    %359 = vmatpush1.bf16.msra.mxu0 %v343
    %360 = vmatprep.subr.bf16.mxu0 0
    %361 = vmatpush1.bf16.msra.mxu0 %v342
    %362 = vmatprep.subr.bf16.mxu0 0
    %363 = vmatpush1.bf16.msra.mxu0 %v341
    %364 = vmatprep.subr.bf16.mxu0 0
    %365 = vmatpush1.bf16.msra.mxu0 %v340
    %366 = vmatprep.subr.bf16.mxu0 0
    %367 = vmatpush1.bf16.msra.mxu0 %v339
    %368 = vmatprep.subr.bf16.mxu0 0
    %369 = vmatpush1.bf16.msra.mxu0 %v338
    %370 = vmatprep.subr.bf16.mxu0 0
    %371 = vmatpush2.bf16.msra.mxu0 0
    %372 = vmatprep.subr.bf16.mxu0 0
    %373 = vmatpush2.bf16.msra.mxu0 0
    %374 = vmatprep.subr.bf16.mxu0 0
    %375 = vmatpush2.bf16.msra.mxu0 0
    %376 = vmatprep.subr.bf16.mxu0 0
    %377 = vmatpush2.bf16.msra.mxu0 0
    %378 = vmatprep.subr.bf16.mxu0 0
    %379 = vmatpush2.bf16.msra.mxu0 0
    %380 = vmatprep.subr.bf16.mxu0 0
    %381 = vmatpush2.bf16.msra.mxu0 0
    %382 = vmatprep.subr.bf16.mxu0 0
    %383 = vmatpush2.bf16.msra.mxu0 0
    %384 = vmatprep.subr.bf16.mxu0 0
    %385 = vmatpush2.bf16.msra.mxu0 0
    %386 = vmatprep.mubr.bf16.mxu0 0
    %387 = vmatmul.mubr.bf16.gmra.mxu0 %v282
    %v388 = vpop.f32.mrf.mxu0
    %v389 = vadd.f32 %v304, %v388
    %v390 = vpop.f32.mrf.mxu0
    %v391 = vpop.f32.mrf.mxu0
    %v392 = vpop.f32.mrf.mxu0
    %393 = vdwg.mxu0
    %v394 = vmax.f32 %v389, 0.0
    %v395 = vpack.c.bf16 %v394, %v394
    %v396 = vld [vmem:[#allocation10] sm:$0xf]
    %v397 = vld [vmem:[#allocation10 + $0x4] sm:$0xf]
    %v398 = vld [vmem:[#allocation10 + $0x8] sm:$0xf]
    %v399 = vld [vmem:[#allocation10 + $0xc] sm:$0xf]
    %v400 = vld [vmem:[#allocation10 + $0x10] sm:$0xf]
    %v401 = vld [vmem:[#allocation10 + $0x14] sm:$0xf]
    %v402 = vld [vmem:[#allocation10 + $0x18] sm:$0xf]
    %v403 = vld [vmem:[#allocation10 + $0x1c] sm:$0xf]
    %v404 = vld [vmem:[#allocation10 + $0x20] sm:$0xf]
    %v405 = vld [vmem:[#allocation10 + $0x24] sm:$0xf]
    %v406 = vld [vmem:[#allocation10 + $0x28] sm:$0xf]
    %v407 = vld [vmem:[#allocation10 + $0x2c] sm:$0xf]
    %v408 = vld [vmem:[#allocation10 + $0x30] sm:$0xf]
    %v409 = vld [vmem:[#allocation10 + $0x34] sm:$0xf]
    %v410 = vld [vmem:[#allocation10 + $0x38] sm:$0xf]
    %v411 = vld [vmem:[#allocation10 + $0x3c] sm:$0xf]
    %v412 = vld [vmem:[%s8] sm:$0x1]
    %v414 = vlaneseq
    %v415 = vshrl.u32 %v414, 7
    %v416 = vsub.s32 0, %v415
    %v417 = vrot.slane %v412, %v416
    %v435 = vunpack.c.l.b16 %v396
    %v436 = vunpack.c.l.b16 %v397
    %v437 = vunpack.c.l.b16 %v398
    %v438 = vunpack.c.l.b16 %v399
    %v439 = vunpack.c.l.b16 %v400
    %v440 = vunpack.c.l.b16 %v401
    %v441 = vunpack.c.l.b16 %v402
    %v442 = vunpack.c.l.b16 %v403
    %v443 = vunpack.c.l.b16 %v404
    %v444 = vunpack.c.l.b16 %v405
    %v445 = vunpack.c.l.b16 %v406
    %v446 = vunpack.c.l.b16 %v407
    %v447 = vunpack.c.l.b16 %v408
    %v448 = vunpack.c.l.b16 %v409
    %v449 = vunpack.c.l.b16 %v410
    %v450 = vunpack.c.l.b16 %v411
    %v451 = vpack.c.b16 %v436, %v435
    %v452 = vpack.c.b16 %v438, %v437
    %v453 = vpack.c.b16 %v440, %v439
    %v454 = vpack.c.b16 %v442, %v441
    %v455 = vpack.c.b16 %v444, %v443
    %v456 = vpack.c.b16 %v446, %v445
    %v457 = vpack.c.b16 %v448, %v447
    %v458 = vpack.c.b16 %v450, %v449
    %467 = vmatprep.subr.bf16.mxu0 0
    %468 = vmatpush1.bf16.msra.mxu0 %v458
    %469 = vmatprep.subr.bf16.mxu0 0
    %470 = vmatpush1.bf16.msra.mxu0 %v457
    %471 = vmatprep.subr.bf16.mxu0 0
    %472 = vmatpush1.bf16.msra.mxu0 %v456
    %473 = vmatprep.subr.bf16.mxu0 0
    %474 = vmatpush1.bf16.msra.mxu0 %v455
    %475 = vmatprep.subr.bf16.mxu0 0
    %476 = vmatpush1.bf16.msra.mxu0 %v454
    %477 = vmatprep.subr.bf16.mxu0 0
    %478 = vmatpush1.bf16.msra.mxu0 %v453
    %479 = vmatprep.subr.bf16.mxu0 0
    %480 = vmatpush1.bf16.msra.mxu0 %v452
    %481 = vmatprep.subr.bf16.mxu0 0
    %482 = vmatpush1.bf16.msra.mxu0 %v451
    %483 = vmatprep.subr.bf16.mxu0 0
    %484 = vmatpush2.bf16.msra.mxu0 0
    %485 = vmatprep.subr.bf16.mxu0 0
    %486 = vmatpush2.bf16.msra.mxu0 0
    %487 = vmatprep.subr.bf16.mxu0 0
    %488 = vmatpush2.bf16.msra.mxu0 0
    %489 = vmatprep.subr.bf16.mxu0 0
    %490 = vmatpush2.bf16.msra.mxu0 0
    %491 = vmatprep.subr.bf16.mxu0 0
    %492 = vmatpush2.bf16.msra.mxu0 0
    %493 = vmatprep.subr.bf16.mxu0 0
    %494 = vmatpush2.bf16.msra.mxu0 0
    %495 = vmatprep.subr.bf16.mxu0 0
    %496 = vmatpush2.bf16.msra.mxu0 0
    %497 = vmatprep.subr.bf16.mxu0 0
    %498 = vmatpush2.bf16.msra.mxu0 0
    %499 = vmatprep.mubr.bf16.mxu0 0
    %500 = vmatmul.mubr.bf16.gmra.mxu0 %v395
    %v501 = vpop.f32.mrf.mxu0
    %v502 = vadd.f32 %v417, %v501
    %v503 = vpop.f32.mrf.mxu0
    %v504 = vpop.f32.mrf.mxu0
    %v505 = vpop.f32.mrf.mxu0
    %506 = vdwg.mxu0
    %507 = vst [vmem:[#allocation11] sm:$0xff] %v502
    // Predicated region
    $region58: #{tpu_custom_call.1} parent=1 // pred_check
      _
    $region59: #{tpu_custom_call.1} parent=1 // pred_check_branch
      %509 = sbr.rel (0) target = $region61
    $region60: #{tpu_custom_call.1} parent=1 // pred_region
      %s511 = ssub.s32 128, 128
      %512 = vsyncadd [#allocation4], %s511
      %s514 = sshll.u32 [#allocation11], 4
      %s515 = int_to_ptr.vmem [resolvable:$true] %s514
      %517 = dma.vmem_to_hbm [thread:$0]  %s515, 128, %s9, [#allocation4]
    $region61: #{tpu_custom_call.1} parent=1 // pred_fallthru
      _
    // Predicated region
    $region62: #{tpu_custom_call.1} parent=1 // pred_check
      _
    $region63: #{tpu_custom_call.1} parent=1 // pred_check_branch
      %519 = sbr.rel (0) target = $region65
    $region64: #{tpu_custom_call.1} parent=1 // pred_region
      %520 = dma.done [#allocation4], 128
    $region65: #{tpu_custom_call.1} parent=1 // pred_fallthru
      _
    %521 = vsyncpa [#allocation3], 1
    %522 = vsyncpa [#allocation6], 1
    %523 = vsyncpa [#allocation9], 1
    %524 = vsyncpa [#allocation4], 1

</llo_original>
